<compile_context>
chip_gen: v7x
topology: tpu7x:2x2x1
jax: 0.10.0
libtpu: 0.0.40
codegen_flags: <defaults>
</compile_context>

<pallas_src>
import math
from functools import partial

import jax
import jax.numpy as jnp
from jax.experimental import pallas as pl
from jax.experimental.pallas import tpu as pltpu


_PAR1 = pltpu.CompilerParams(dimension_semantics=("parallel",))


# ----------------------------- Pallas kernels -----------------------------

def _self_attn_core_kernel(y_ref, wqkv_ref, bqkv_ref, mask_ref, o_ref, qkv_sc,
                           *, num_heads, scale):
    """Fused QKV projection + per-head masked attention for one batch element.

    y_ref:    (S, D)  bf16        wqkv_ref: (D, 3D) bf16     bqkv_ref: (1, 3D) f32
    mask_ref: (S, S)  f32         o_ref:    (H, S, Dh) bf16  qkv_sc:   (S, 3D) bf16 VMEM
    """
    S, D = y_ref.shape
    Dh = D // num_heads
    qkv = jnp.dot(y_ref[...], wqkv_ref[...], preferred_element_type=jnp.float32)
    qkv_sc[...] = (qkv + bqkv_ref[...]).astype(qkv_sc.dtype)
    for h in range(num_heads):
        base = h * 3 * Dh
        q = qkv_sc[:, base:base + Dh]
        k = qkv_sc[:, base + Dh:base + 2 * Dh]
        v = qkv_sc[:, base + 2 * Dh:base + 3 * Dh]
        # q @ k^T via dot_general contracting last dims (no materialized k.T)
        s = jax.lax.dot_general(q, k, (((1,), (1,)), ((), ())),
                                preferred_element_type=jnp.float32) * scale
        s = s + mask_ref[...]
        m = jnp.max(s, axis=-1, keepdims=True)
        p = jnp.exp(s - m)
        p = p * pl.reciprocal(jnp.sum(p, axis=-1, keepdims=True), approx=True)
        o_ref[h, :, :] = jnp.dot(p.astype(v.dtype), v,
                                 preferred_element_type=jnp.float32).astype(o_ref.dtype)


def _cross_attn_core_kernel(x_ref, y_ref, wkv_ref, bkv_ref, wq_ref, bq_ref,
                            o_ref, kv_sc, q_sc, *, num_heads, scale):
    """Fused KV + Q projections + per-head attention (no mask) for one batch element."""
    S, D = y_ref.shape
    Dh = D // num_heads
    kv = jnp.dot(x_ref[...], wkv_ref[...], preferred_element_type=jnp.float32)
    kv_sc[...] = (kv + bkv_ref[...]).astype(kv_sc.dtype)
    q = jnp.dot(y_ref[...], wq_ref[...], preferred_element_type=jnp.float32)
    q_sc[...] = (q + bq_ref[...]).astype(q_sc.dtype)
    for h in range(num_heads):
        base = h * 2 * Dh
        k = kv_sc[:, base:base + Dh]
        v = kv_sc[:, base + Dh:base + 2 * Dh]
        qh = q_sc[:, h * Dh:(h + 1) * Dh]
        s = jax.lax.dot_general(qh, k, (((1,), (1,)), ((), ())),
                                preferred_element_type=jnp.float32) * scale
        m = jnp.max(s, axis=-1, keepdims=True)
        p = jnp.exp(s - m)
        p = p * pl.reciprocal(jnp.sum(p, axis=-1, keepdims=True), approx=True)
        o_ref[h, :, :] = jnp.dot(p.astype(v.dtype), v,
                                 preferred_element_type=jnp.float32).astype(o_ref.dtype)


def _proj_add_ln_kernel(v_ref, res_ref, w_ref, b_ref, g_ref, be_ref, o_ref, *, eps):
    """o = LayerNorm(v @ w + b + residual) * gamma + beta, f32 epilogue on the accumulator."""
    acc = jnp.dot(v_ref[...], w_ref[...], preferred_element_type=jnp.float32)
    y = acc + b_ref[...] + res_ref[...].astype(jnp.float32)
    mean = jnp.mean(y, axis=-1, keepdims=True)
    yc = y - mean
    var = jnp.mean(yc * yc, axis=-1, keepdims=True)
    o_ref[...] = (g_ref[...] * (yc * jax.lax.rsqrt(var + eps)) + be_ref[...]).astype(o_ref.dtype)


def _ffn_add_ln_kernel(y_ref, w1_ref, b1_ref, w2_ref, b2_ref, g_ref, be_ref, o_ref, *, eps):
    """o = LayerNorm(relu(y@w1+b1)@w2 + b2 + y) * gamma + beta; ReLU intermediate stays in VMEM."""
    h = jnp.dot(y_ref[...], w1_ref[...], preferred_element_type=jnp.float32) + b1_ref[...]
    h = jnp.maximum(h, 0.0).astype(w2_ref.dtype)
    z = jnp.dot(h, w2_ref[...], preferred_element_type=jnp.float32) + b2_ref[...]
    y = z + y_ref[...].astype(jnp.float32)
    mean = jnp.mean(y, axis=-1, keepdims=True)
    yc = y - mean
    var = jnp.mean(yc * yc, axis=-1, keepdims=True)
    o_ref[...] = (g_ref[...] * (yc * jax.lax.rsqrt(var + eps)) + be_ref[...]).astype(o_ref.dtype)


# ----------------------------- wrappers -----------------------------------

def _row_tile(M, target=256):
    """Largest divisor of M that is <= target and a multiple of 8, else M (full block)."""
    if M <= target:
        return M
    t = (target // 8) * 8
    while t >= 8:
        if M % t == 0:
            return t
        t -= 8
    return M


def self_attention_core(y, w_qkv, b_qkv, mask, num_heads):
    B, S, D = y.shape
    Dh = D // num_heads
    kern = partial(_self_attn_core_kernel, num_heads=num_heads, scale=1.0 / math.sqrt(Dh))
    return pl.pallas_call(
        kern,
        out_shape=jax.ShapeDtypeStruct((B, num_heads, S, Dh), jnp.bfloat16),
        grid=(B,),
        in_specs=[
            pl.BlockSpec((None, S, D), lambda b: (b, 0, 0)),
            pl.BlockSpec((D, 3 * D), lambda b: (0, 0)),
            pl.BlockSpec((1, 3 * D), lambda b: (0, 0)),
            pl.BlockSpec((S, S), lambda b: (0, 0)),
        ],
        out_specs=pl.BlockSpec((None, num_heads, S, Dh), lambda b: (b, 0, 0, 0)),
        scratch_shapes=[pltpu.VMEM((S, 3 * D), jnp.bfloat16)],
        compiler_params=_PAR1,
    )(y, w_qkv, b_qkv.reshape(1, 3 * D), mask)


def cross_attention_core(x, y, w_kv, b_kv, w_q, b_q, num_heads):
    B, S, D = y.shape
    Dh = D // num_heads
    kern = partial(_cross_attn_core_kernel, num_heads=num_heads, scale=1.0 / math.sqrt(Dh))
    return pl.pallas_call(
        kern,
        out_shape=jax.ShapeDtypeStruct((B, num_heads, S, Dh), jnp.bfloat16),
        grid=(B,),
        in_specs=[
            pl.BlockSpec((None, S, D), lambda b: (b, 0, 0)),   # encoder output -> K, V
            pl.BlockSpec((None, S, D), lambda b: (b, 0, 0)),   # decoder state  -> Q
            pl.BlockSpec((D, 2 * D), lambda b: (0, 0)),
            pl.BlockSpec((1, 2 * D), lambda b: (0, 0)),
            pl.BlockSpec((D, D), lambda b: (0, 0)),
            pl.BlockSpec((1, D), lambda b: (0, 0)),
        ],
        out_specs=pl.BlockSpec((None, num_heads, S, Dh), lambda b: (b, 0, 0, 0)),
        scratch_shapes=[pltpu.VMEM((S, 2 * D), jnp.bfloat16),
                        pltpu.VMEM((S, D), jnp.bfloat16)],
        compiler_params=_PAR1,
    )(x, y, w_kv, b_kv.reshape(1, 2 * D), w_q, b_q.reshape(1, D))


def proj_add_ln(vals2d, res2d, w, b, gamma, beta, eps=1e-5):
    M, D = vals2d.shape
    N = w.shape[1]
    tm = _row_tile(M)
    kern = partial(_proj_add_ln_kernel, eps=eps)
    return pl.pallas_call(
        kern,
        out_shape=jax.ShapeDtypeStruct((M, N), jnp.bfloat16),
        grid=(M // tm,),
        in_specs=[
            pl.BlockSpec((tm, D), lambda i: (i, 0)),
            pl.BlockSpec((tm, N), lambda i: (i, 0)),
            pl.BlockSpec((D, N), lambda i: (0, 0)),
            pl.BlockSpec((1, N), lambda i: (0, 0)),
            pl.BlockSpec((1, N), lambda i: (0, 0)),
            pl.BlockSpec((1, N), lambda i: (0, 0)),
        ],
        out_specs=pl.BlockSpec((tm, N), lambda i: (i, 0)),
        compiler_params=_PAR1,
    )(vals2d, res2d, w, b.reshape(1, N), gamma.reshape(1, N), beta.reshape(1, N))


def ffn_add_ln(y2d, w1, b1, w2, b2, gamma, beta, eps=1e-5):
    M, D = y2d.shape
    H = w1.shape[1]
    tm = _row_tile(M)
    kern = partial(_ffn_add_ln_kernel, eps=eps)
    return pl.pallas_call(
        kern,
        out_shape=jax.ShapeDtypeStruct((M, D), jnp.bfloat16),
        grid=(M // tm,),
        in_specs=[
            pl.BlockSpec((tm, D), lambda i: (i, 0)),
            pl.BlockSpec((D, H), lambda i: (0, 0)),
            pl.BlockSpec((1, H), lambda i: (0, 0)),
            pl.BlockSpec((H, D), lambda i: (0, 0)),
            pl.BlockSpec((1, D), lambda i: (0, 0)),
            pl.BlockSpec((1, D), lambda i: (0, 0)),
            pl.BlockSpec((1, D), lambda i: (0, 0)),
        ],
        out_specs=pl.BlockSpec((tm, D), lambda i: (i, 0)),
        compiler_params=_PAR1,
    )(y2d, w1, b1.reshape(1, H), w2, b2.reshape(1, D),
      gamma.reshape(1, D), beta.reshape(1, D))


# ----------------------------- decoder model ------------------------------

def decoder_layer(x_bf, y_bf, mask, p, num_heads):
    B, S, D = y_bf.shape
    # masked self-attention -> out-proj + residual + LayerNorm (fused epilogue)
    vals = self_attention_core(y_bf, p["w_qkv"], p["b_qkv"], mask, num_heads)
    # (B,H,S,Dh) -> (B*S,D): contiguous row-major reinterpretation, identical to the
    # reference PyTorch `values.reshape(B, S, d_model)` (no head transpose) and free.
    vals2d = vals.reshape(B * S, D)
    y2d = proj_add_ln(vals2d, y_bf.reshape(B * S, D),
                      p["w_out1"], p["b_out1"], p["gamma1"], p["beta1"])
    y_bf = y2d.reshape(B, S, D)

    # cross-attention -> out-proj + residual + LayerNorm
    vals = cross_attention_core(x_bf, y_bf, p["w_kv"], p["b_kv"],
                                p["w_q"], p["b_q"], num_heads)
    vals2d = vals.reshape(B * S, D)
    y2d = proj_add_ln(vals2d, y_bf.reshape(B * S, D),
                      p["w_out2"], p["b_out2"], p["gamma2"], p["beta2"])
    y_bf = y2d.reshape(B, S, D)

    # FFN + residual + LayerNorm (residual == FFN input, fused entirely in one kernel)
    y2d = ffn_add_ln(y_bf.reshape(B * S, D), p["w1"], p["b1"], p["w2"], p["b2"],
                     p["gamma3"], p["beta3"])
    return y2d.reshape(B, S, D)


def decoder_forward(x, y, mask, params, num_heads):
    x_bf = x.astype(jnp.bfloat16)
    y_bf = y.astype(jnp.bfloat16)
    mask = mask.astype(jnp.float32)
    for p in params:
        y_bf = decoder_layer(x_bf, y_bf, mask, p, num_heads)
    return y_bf.astype(jnp.float32)


# ----------------------------- param init ---------------------------------

def init_params(key, d_model, ffn_hidden, num_layers):
    params = []
    scale = 1.0 / math.sqrt(d_model)
    wdt = jnp.bfloat16
    for layer in range(num_layers):
        keys = jax.random.split(jax.random.fold_in(key, layer), 8)
        p = {
            "w_qkv": (scale * jax.random.normal(keys[0], (d_model, 3 * d_model), jnp.float32)).astype(wdt),
            "b_qkv": jnp.zeros((3 * d_model,), jnp.float32),
            "w_out1": (scale * jax.random.normal(keys[1], (d_model, d_model), jnp.float32)).astype(wdt),
            "b_out1": jnp.zeros((d_model,), jnp.float32),
            "gamma1": jnp.ones((d_model,), jnp.float32),
            "beta1": jnp.zeros((d_model,), jnp.float32),
            "w_kv": (scale * jax.random.normal(keys[2], (d_model, 2 * d_model), jnp.float32)).astype(wdt),
            "b_kv": jnp.zeros((2 * d_model,), jnp.float32),
            "w_q": (scale * jax.random.normal(keys[3], (d_model, d_model), jnp.float32)).astype(wdt),
            "b_q": jnp.zeros((d_model,), jnp.float32),
            "w_out2": (scale * jax.random.normal(keys[4], (d_model, d_model), jnp.float32)).astype(wdt),
            "b_out2": jnp.zeros((d_model,), jnp.float32),
            "gamma2": jnp.ones((d_model,), jnp.float32),
            "beta2": jnp.zeros((d_model,), jnp.float32),
            "w1": (scale * jax.random.normal(keys[5], (d_model, ffn_hidden), jnp.float32)).astype(wdt),
            "b1": jnp.zeros((ffn_hidden,), jnp.float32),
            "w2": ((1.0 / math.sqrt(ffn_hidden)) * jax.random.normal(keys[6], (ffn_hidden, d_model), jnp.float32)).astype(wdt),
            "b2": jnp.zeros((d_model,), jnp.float32),
            "gamma3": jnp.ones((d_model,), jnp.float32),
            "beta3": jnp.zeros((d_model,), jnp.float32),
        }
        params.append(p)
    return params


# ----------------------------- main ----------------------------------------

if __name__ == "__main__":
    # Small shapes consistent with the module (d_model divisible by num_heads,
    # d_model kept at 128 so slab kernels are lane-dense).
    batch = 2
    seq = 16
    d_model = 128
    num_heads = 4
    ffn_hidden = 256
    num_layers = 2

    key = jax.random.PRNGKey(0)
    kx, ky, kp = jax.random.split(key, 3)
    x = jax.random.normal(kx, (batch, seq, d_model), jnp.float32)   # encoder output
    y = jax.random.normal(ky, (batch, seq, d_model), jnp.float32)   # decoder input

    # causal mask: -inf (approximated by -1e9) above the diagonal, 0 elsewhere
    row = jnp.arange(seq)[:, None]
    col = jnp.arange(seq)[None, :]
    mask = jnp.where(col > row, -1e9, 0.0).astype(jnp.float32)

    params = init_params(kp, d_model, ffn_hidden, num_layers)

    out = decoder_forward(x, y, mask, params, num_heads)
    out = jax.block_until_ready(out)

    assert out.shape == (batch, seq, d_model)
    assert bool(jnp.all(jnp.isfinite(out)))
    print("KERNEL_OK")
</pallas_src>

<mosaic_0001>
module attributes {stable_mosaic.version = 11 : i64} {
  func.func @_self_attn_core_kernel(%arg0: i32, %arg1: memref<1x16x128xbf16, #tpu.memory_space<vmem>>, %arg2: memref<128x384xbf16, #tpu.memory_space<vmem>>, %arg3: memref<1x384xf32, #tpu.memory_space<vmem>>, %arg4: memref<16x16xf32, #tpu.memory_space<vmem>>, %arg5: memref<1x4x16x32xbf16, #tpu.memory_space<vmem>>, %arg6: memref<16x384xbf16, #tpu.memory_space<vmem>>) attributes {dimension_semantics = [#tpu.dimension_semantics<parallel>], iteration_bounds = array<i64: 2>, scalar_prefetch = 0 : i64, scratch_operands = 1 : i64, tpu.core_type = #tpu.core_type<tc>, window_params = [{transform_indices = @transform_0, window_bounds = array<i64: 1, 16, 128>}, {pipeline_mode = #tpu.pipeline_mode<synchronous>, transform_indices = @transform_1, window_bounds = array<i64: 128, 384>}, {pipeline_mode = #tpu.pipeline_mode<synchronous>, transform_indices = @transform_2, window_bounds = array<i64: 1, 384>}, {pipeline_mode = #tpu.pipeline_mode<synchronous>, transform_indices = @transform_3, window_bounds = array<i64: 16, 16>}, {transform_indices = @transform_4, window_bounds = array<i64: 1, 4, 16, 32>}]} {
    %c0 = arith.constant 0 : index
    %c0_0 = arith.constant 0 : index
    %c0_1 = arith.constant 0 : index
    %0 = vector.load %arg1[%c0, %c0_0, %c0_1] : memref<1x16x128xbf16, #tpu.memory_space<vmem>>, vector<1x16x128xbf16>
    %1 = vector.shape_cast %0 : vector<1x16x128xbf16> to vector<16x128xbf16>
    %c0_2 = arith.constant 0 : index
    %c0_3 = arith.constant 0 : index
    %2 = vector.load %arg2[%c0_2, %c0_3] : memref<128x384xbf16, #tpu.memory_space<vmem>>, vector<128x384xbf16>
    %cst = arith.constant dense<0.000000e+00> : vector<16x384xf32>
    %3 = tpu.matmul %1, %2, %cst {dimension_numbers = #tpu.dot_dimension_numbers<[1], [0], [0], [1], [0, 0, 1, 1], [], []>} : vector<16x128xbf16>, vector<128x384xbf16>, vector<16x384xf32> -> vector<16x384xf32>
    %c0_4 = arith.constant 0 : index
    %c0_5 = arith.constant 0 : index
    %4 = vector.load %arg3[%c0_4, %c0_5] : memref<1x384xf32, #tpu.memory_space<vmem>>, vector<1x384xf32>
    %5 = vector.broadcast %4 : vector<1x384xf32> to vector<16x384xf32>
    %6 = arith.addf %3, %5 : vector<16x384xf32>
    %7 = arith.truncf %6 : vector<16x384xf32> to vector<16x384xbf16>
    %c0_6 = arith.constant 0 : index
    %c0_7 = arith.constant 0 : index
    %8 = vector.load %arg6[%c0_6, %c0_7] : memref<16x384xbf16, #tpu.memory_space<vmem>>, vector<16x384xbf16>
    tpu.vector_store %arg6[%c0_6, %c0_7], %7 {strides = array<i32>} : memref<16x384xbf16, #tpu.memory_space<vmem>>, vector<16x384xbf16>,
    %c0_8 = arith.constant 0 : index
    %c0_9 = arith.constant 0 : index
    %9 = vector.load %arg6[%c0_8, %c0_9] : memref<16x384xbf16, #tpu.memory_space<vmem>>, vector<16x32xbf16>
    %c0_10 = arith.constant 0 : index
    %c32 = arith.constant 32 : index
    %10 = vector.load %arg6[%c0_10, %c32] : memref<16x384xbf16, #tpu.memory_space<vmem>>, vector<16x32xbf16>
    %c0_11 = arith.constant 0 : index
    %c64 = arith.constant 64 : index
    %11 = vector.load %arg6[%c0_11, %c64] : memref<16x384xbf16, #tpu.memory_space<vmem>>, vector<16x32xbf16>
    %cst_12 = arith.constant dense<0.000000e+00> : vector<16x16xf32>
    %12 = tpu.matmul %9, %10, %cst_12 {dimension_numbers = #tpu.dot_dimension_numbers<[1], [1], [0], [0], [0, 0, 1, 0], [], []>} : vector<16x32xbf16>, vector<16x32xbf16>, vector<16x16xf32> -> vector<16x16xf32>
    %cst_13 = arith.constant 0.176776692 : f32
    %13 = vector.broadcast %cst_13 : f32 to vector<16x16xf32>
    %14 = arith.mulf %12, %13 : vector<16x16xf32>
    %c0_14 = arith.constant 0 : index
    %c0_15 = arith.constant 0 : index
    %15 = vector.load %arg4[%c0_14, %c0_15] : memref<16x16xf32, #tpu.memory_space<vmem>>, vector<16x16xf32>
    %16 = arith.addf %14, %15 : vector<16x16xf32>
    %cst_16 = arith.constant dense<0xFF800000> : vector<16xf32>
    %17 = vector.multi_reduction <maximumf>, %16, %cst_16 [1] : vector<16x16xf32> to vector<16xf32>
    %18 = vector.shape_cast %17 : vector<16xf32> to vector<16x1xf32>
    %19 = vector.broadcast %18 : vector<16x1xf32> to vector<16x16xf32>
    %20 = arith.subf %16, %19 : vector<16x16xf32>
    %21 = math.exp %20 : vector<16x16xf32>
    %cst_17 = arith.constant dense<0.000000e+00> : vector<16xf32>
    %22 = vector.multi_reduction <add>, %21, %cst_17 [1] : vector<16x16xf32> to vector<16xf32>
    %23 = vector.shape_cast %22 : vector<16xf32> to vector<16x1xf32>
    %24 = tpu.reciprocal %23 {approx = true} : vector<16x1xf32> -> vector<16x1xf32>
    %25 = vector.broadcast %24 : vector<16x1xf32> to vector<16x16xf32>
    %26 = arith.mulf %21, %25 : vector<16x16xf32>
    %27 = arith.truncf %26 : vector<16x16xf32> to vector<16x16xbf16>
    %cst_18 = arith.constant dense<0.000000e+00> : vector<16x32xf32>
    %28 = tpu.matmul %27, %11, %cst_18 {dimension_numbers = #tpu.dot_dimension_numbers<[1], [0], [0], [1], [0, 0, 1, 1], [], []>} : vector<16x16xbf16>, vector<16x32xbf16>, vector<16x32xf32> -> vector<16x32xf32>
    %29 = arith.truncf %28 : vector<16x32xf32> to vector<16x32xbf16>
    %c0_19 = arith.constant 0 : index
    %c0_20 = arith.constant 0 : index
    %c0_21 = arith.constant 0 : index
    %c0_22 = arith.constant 0 : index
    %30 = vector.load %arg5[%c0_19, %c0_20, %c0_21, %c0_22] : memref<1x4x16x32xbf16, #tpu.memory_space<vmem>>, vector<1x1x16x32xbf16>
    %31 = vector.shape_cast %30 : vector<1x1x16x32xbf16> to vector<16x32xbf16>
    %32 = vector.shape_cast %29 : vector<16x32xbf16> to vector<1x1x16x32xbf16>
    tpu.vector_store %arg5[%c0_19, %c0_20, %c0_21, %c0_22], %32 {strides = array<i32>} : memref<1x4x16x32xbf16, #tpu.memory_space<vmem>>, vector<1x1x16x32xbf16>,
    %c0_23 = arith.constant 0 : index
    %c96 = arith.constant 96 : index
    %33 = vector.load %arg6[%c0_23, %c96] : memref<16x384xbf16, #tpu.memory_space<vmem>>, vector<16x32xbf16>
    %c0_24 = arith.constant 0 : index
    %c128 = arith.constant 128 : index
    %34 = vector.load %arg6[%c0_24, %c128] : memref<16x384xbf16, #tpu.memory_space<vmem>>, vector<16x32xbf16>
    %c0_25 = arith.constant 0 : index
    %c160 = arith.constant 160 : index
    %35 = vector.load %arg6[%c0_25, %c160] : memref<16x384xbf16, #tpu.memory_space<vmem>>, vector<16x32xbf16>
    %cst_26 = arith.constant dense<0.000000e+00> : vector<16x16xf32>
    %36 = tpu.matmul %33, %34, %cst_26 {dimension_numbers = #tpu.dot_dimension_numbers<[1], [1], [0], [0], [0, 0, 1, 0], [], []>} : vector<16x32xbf16>, vector<16x32xbf16>, vector<16x16xf32> -> vector<16x16xf32>
    %cst_27 = arith.constant 0.176776692 : f32
    %37 = vector.broadcast %cst_27 : f32 to vector<16x16xf32>
    %38 = arith.mulf %36, %37 : vector<16x16xf32>
    %c0_28 = arith.constant 0 : index
    %c0_29 = arith.constant 0 : index
    %39 = vector.load %arg4[%c0_28, %c0_29] : memref<16x16xf32, #tpu.memory_space<vmem>>, vector<16x16xf32>
    %40 = arith.addf %38, %39 : vector<16x16xf32>
    %cst_30 = arith.constant dense<0xFF800000> : vector<16xf32>
    %41 = vector.multi_reduction <maximumf>, %40, %cst_30 [1] : vector<16x16xf32> to vector<16xf32>
    %42 = vector.shape_cast %41 : vector<16xf32> to vector<16x1xf32>
    %43 = vector.broadcast %42 : vector<16x1xf32> to vector<16x16xf32>
    %44 = arith.subf %40, %43 : vector<16x16xf32>
    %45 = math.exp %44 : vector<16x16xf32>
    %cst_31 = arith.constant dense<0.000000e+00> : vector<16xf32>
    %46 = vector.multi_reduction <add>, %45, %cst_31 [1] : vector<16x16xf32> to vector<16xf32>
    %47 = vector.shape_cast %46 : vector<16xf32> to vector<16x1xf32>
    %48 = tpu.reciprocal %47 {approx = true} : vector<16x1xf32> -> vector<16x1xf32>
    %49 = vector.broadcast %48 : vector<16x1xf32> to vector<16x16xf32>
    %50 = arith.mulf %45, %49 : vector<16x16xf32>
    %51 = arith.truncf %50 : vector<16x16xf32> to vector<16x16xbf16>
    %cst_32 = arith.constant dense<0.000000e+00> : vector<16x32xf32>
    %52 = tpu.matmul %51, %35, %cst_32 {dimension_numbers = #tpu.dot_dimension_numbers<[1], [0], [0], [1], [0, 0, 1, 1], [], []>} : vector<16x16xbf16>, vector<16x32xbf16>, vector<16x32xf32> -> vector<16x32xf32>
    %53 = arith.truncf %52 : vector<16x32xf32> to vector<16x32xbf16>
    %c0_33 = arith.constant 0 : index
    %c1 = arith.constant 1 : index
    %c0_34 = arith.constant 0 : index
    %c0_35 = arith.constant 0 : index
    %54 = vector.load %arg5[%c0_33, %c1, %c0_34, %c0_35] : memref<1x4x16x32xbf16, #tpu.memory_space<vmem>>, vector<1x1x16x32xbf16>
    %55 = vector.shape_cast %54 : vector<1x1x16x32xbf16> to vector<16x32xbf16>
    %56 = vector.shape_cast %53 : vector<16x32xbf16> to vector<1x1x16x32xbf16>
    tpu.vector_store %arg5[%c0_33, %c1, %c0_34, %c0_35], %56 {strides = array<i32>} : memref<1x4x16x32xbf16, #tpu.memory_space<vmem>>, vector<1x1x16x32xbf16>,
    %c0_36 = arith.constant 0 : index
    %c192 = arith.constant 192 : index
    %57 = vector.load %arg6[%c0_36, %c192] : memref<16x384xbf16, #tpu.memory_space<vmem>>, vector<16x32xbf16>
    %c0_37 = arith.constant 0 : index
    %c224 = arith.constant 224 : index
    %58 = vector.load %arg6[%c0_37, %c224] : memref<16x384xbf16, #tpu.memory_space<vmem>>, vector<16x32xbf16>
    %c0_38 = arith.constant 0 : index
    %c256 = arith.constant 256 : index
    %59 = vector.load %arg6[%c0_38, %c256] : memref<16x384xbf16, #tpu.memory_space<vmem>>, vector<16x32xbf16>
    %cst_39 = arith.constant dense<0.000000e+00> : vector<16x16xf32>
    %60 = tpu.matmul %57, %58, %cst_39 {dimension_numbers = #tpu.dot_dimension_numbers<[1], [1], [0], [0], [0, 0, 1, 0], [], []>} : vector<16x32xbf16>, vector<16x32xbf16>, vector<16x16xf32> -> vector<16x16xf32>
    %cst_40 = arith.constant 0.176776692 : f32
    %61 = vector.broadcast %cst_40 : f32 to vector<16x16xf32>
    %62 = arith.mulf %60, %61 : vector<16x16xf32>
    %c0_41 = arith.constant 0 : index
    %c0_42 = arith.constant 0 : index
    %63 = vector.load %arg4[%c0_41, %c0_42] : memref<16x16xf32, #tpu.memory_space<vmem>>, vector<16x16xf32>
    %64 = arith.addf %62, %63 : vector<16x16xf32>
    %cst_43 = arith.constant dense<0xFF800000> : vector<16xf32>
    %65 = vector.multi_reduction <maximumf>, %64, %cst_43 [1] : vector<16x16xf32> to vector<16xf32>
    %66 = vector.shape_cast %65 : vector<16xf32> to vector<16x1xf32>
    %67 = vector.broadcast %66 : vector<16x1xf32> to vector<16x16xf32>
    %68 = arith.subf %64, %67 : vector<16x16xf32>
    %69 = math.exp %68 : vector<16x16xf32>
    %cst_44 = arith.constant dense<0.000000e+00> : vector<16xf32>
    %70 = vector.multi_reduction <add>, %69, %cst_44 [1] : vector<16x16xf32> to vector<16xf32>
    %71 = vector.shape_cast %70 : vector<16xf32> to vector<16x1xf32>
    %72 = tpu.reciprocal %71 {approx = true} : vector<16x1xf32> -> vector<16x1xf32>
    %73 = vector.broadcast %72 : vector<16x1xf32> to vector<16x16xf32>
    %74 = arith.mulf %69, %73 : vector<16x16xf32>
    %75 = arith.truncf %74 : vector<16x16xf32> to vector<16x16xbf16>
    %cst_45 = arith.constant dense<0.000000e+00> : vector<16x32xf32>
    %76 = tpu.matmul %75, %59, %cst_45 {dimension_numbers = #tpu.dot_dimension_numbers<[1], [0], [0], [1], [0, 0, 1, 1], [], []>} : vector<16x16xbf16>, vector<16x32xbf16>, vector<16x32xf32> -> vector<16x32xf32>
    %77 = arith.truncf %76 : vector<16x32xf32> to vector<16x32xbf16>
    %c0_46 = arith.constant 0 : index
    %c2 = arith.constant 2 : index
    %c0_47 = arith.constant 0 : index
    %c0_48 = arith.constant 0 : index
    %78 = vector.load %arg5[%c0_46, %c2, %c0_47, %c0_48] : memref<1x4x16x32xbf16, #tpu.memory_space<vmem>>, vector<1x1x16x32xbf16>
    %79 = vector.shape_cast %78 : vector<1x1x16x32xbf16> to vector<16x32xbf16>
    %80 = vector.shape_cast %77 : vector<16x32xbf16> to vector<1x1x16x32xbf16>
    tpu.vector_store %arg5[%c0_46, %c2, %c0_47, %c0_48], %80 {strides = array<i32>} : memref<1x4x16x32xbf16, #tpu.memory_space<vmem>>, vector<1x1x16x32xbf16>,
    %c0_49 = arith.constant 0 : index
    %c288 = arith.constant 288 : index
    %81 = vector.load %arg6[%c0_49, %c288] : memref<16x384xbf16, #tpu.memory_space<vmem>>, vector<16x32xbf16>
    %c0_50 = arith.constant 0 : index
    %c320 = arith.constant 320 : index
    %82 = vector.load %arg6[%c0_50, %c320] : memref<16x384xbf16, #tpu.memory_space<vmem>>, vector<16x32xbf16>
    %c0_51 = arith.constant 0 : index
    %c352 = arith.constant 352 : index
    %83 = vector.load %arg6[%c0_51, %c352] : memref<16x384xbf16, #tpu.memory_space<vmem>>, vector<16x32xbf16>
    %cst_52 = arith.constant dense<0.000000e+00> : vector<16x16xf32>
    %84 = tpu.matmul %81, %82, %cst_52 {dimension_numbers = #tpu.dot_dimension_numbers<[1], [1], [0], [0], [0, 0, 1, 0], [], []>} : vector<16x32xbf16>, vector<16x32xbf16>, vector<16x16xf32> -> vector<16x16xf32>
    %cst_53 = arith.constant 0.176776692 : f32
    %85 = vector.broadcast %cst_53 : f32 to vector<16x16xf32>
    %86 = arith.mulf %84, %85 : vector<16x16xf32>
    %c0_54 = arith.constant 0 : index
    %c0_55 = arith.constant 0 : index
    %87 = vector.load %arg4[%c0_54, %c0_55] : memref<16x16xf32, #tpu.memory_space<vmem>>, vector<16x16xf32>
    %88 = arith.addf %86, %87 : vector<16x16xf32>
    %cst_56 = arith.constant dense<0xFF800000> : vector<16xf32>
    %89 = vector.multi_reduction <maximumf>, %88, %cst_56 [1] : vector<16x16xf32> to vector<16xf32>
    %90 = vector.shape_cast %89 : vector<16xf32> to vector<16x1xf32>
    %91 = vector.broadcast %90 : vector<16x1xf32> to vector<16x16xf32>
    %92 = arith.subf %88, %91 : vector<16x16xf32>
    %93 = math.exp %92 : vector<16x16xf32>
    %cst_57 = arith.constant dense<0.000000e+00> : vector<16xf32>
    %94 = vector.multi_reduction <add>, %93, %cst_57 [1] : vector<16x16xf32> to vector<16xf32>
    %95 = vector.shape_cast %94 : vector<16xf32> to vector<16x1xf32>
    %96 = tpu.reciprocal %95 {approx = true} : vector<16x1xf32> -> vector<16x1xf32>
    %97 = vector.broadcast %96 : vector<16x1xf32> to vector<16x16xf32>
    %98 = arith.mulf %93, %97 : vector<16x16xf32>
    %99 = arith.truncf %98 : vector<16x16xf32> to vector<16x16xbf16>
    %cst_58 = arith.constant dense<0.000000e+00> : vector<16x32xf32>
    %100 = tpu.matmul %99, %83, %cst_58 {dimension_numbers = #tpu.dot_dimension_numbers<[1], [0], [0], [1], [0, 0, 1, 1], [], []>} : vector<16x16xbf16>, vector<16x32xbf16>, vector<16x32xf32> -> vector<16x32xf32>
    %101 = arith.truncf %100 : vector<16x32xf32> to vector<16x32xbf16>
    %c0_59 = arith.constant 0 : index
    %c3 = arith.constant 3 : index
    %c0_60 = arith.constant 0 : index
    %c0_61 = arith.constant 0 : index
    %102 = vector.load %arg5[%c0_59, %c3, %c0_60, %c0_61] : memref<1x4x16x32xbf16, #tpu.memory_space<vmem>>, vector<1x1x16x32xbf16>
    %103 = vector.shape_cast %102 : vector<1x1x16x32xbf16> to vector<16x32xbf16>
    %104 = vector.shape_cast %101 : vector<16x32xbf16> to vector<1x1x16x32xbf16>
    tpu.vector_store %arg5[%c0_59, %c3, %c0_60, %c0_61], %104 {strides = array<i32>} : memref<1x4x16x32xbf16, #tpu.memory_space<vmem>>, vector<1x1x16x32xbf16>,
    return
  }
  func.func @transform_0(%arg0: i32) -> (i32, i32, i32) {
    %c0_i32 = arith.constant 0 : i32
    %c0_i32_0 = arith.constant 0 : i32
    %c0_i32_1 = arith.constant 0 : i32
    return %arg0, %c0_i32, %c0_i32_0 : i32, i32, i32
  }
  func.func @transform_1(%arg0: i32) -> (i32, i32) {
    %c0_i32 = arith.constant 0 : i32
    %c0_i32_0 = arith.constant 0 : i32
    %c0_i32_1 = arith.constant 0 : i32
    return %c0_i32, %c0_i32_0 : i32, i32
  }
  func.func @transform_2(%arg0: i32) -> (i32, i32) {
    %c0_i32 = arith.constant 0 : i32
    %c0_i32_0 = arith.constant 0 : i32
    %c0_i32_1 = arith.constant 0 : i32
    return %c0_i32, %c0_i32_0 : i32, i32
  }
  func.func @transform_3(%arg0: i32) -> (i32, i32) {
    %c0_i32 = arith.constant 0 : i32
    %c0_i32_0 = arith.constant 0 : i32
    %c0_i32_1 = arith.constant 0 : i32
    return %c0_i32, %c0_i32_0 : i32, i32
  }
  func.func @transform_4(%arg0: i32) -> (i32, i32, i32, i32) {
    %c0_i32 = arith.constant 0 : i32
    %c0_i32_0 = arith.constant 0 : i32
    %c0_i32_1 = arith.constant 0 : i32
    %c0_i32_2 = arith.constant 0 : i32
    return %arg0, %c0_i32, %c0_i32_0, %c0_i32_1 : i32, i32, i32, i32
  }
}

</mosaic_0001>

<llo_original>
// kernel: tpu_custom_call.1
$region0: #{tpu_custom_call.1}
  #allocation0 [shape = 'u32[]', space=smem, size = 0x4, offset = 0x4, fixed_abs, tag = 'smem constant byte address 0x4 - core index']
  #allocation1 [shape = 'u32[144,128]{1,0:T(1,128)}', space=vmem, size = 0x12000, scoped, tag = 'internal scratch']
  #allocation2 [shape = 'bf16[16,384]{1,0:T(16,128)(2,1)}', space=vmem, size = 0x3000, scoped, tag = 'scratch operand']
  %s0 = inlined_call_operand.hbm [shape: bf16[2,16,128], index: 0, kind: input, shape index: {}]
  %s1 = inlined_call_operand.hbm [shape: bf16[128,384], index: 1, kind: input, shape index: {}]
  %s2 = inlined_call_operand.vmem [shape: f32[1,384], index: 2, kind: input, shape index: {}]
  %s3 = inlined_call_operand.hbm [shape: f32[16,16], index: 3, kind: input, shape index: {}]
  %s4 = inlined_call_operand.hbm [shape: bf16[2,4,16,32], index: 4, kind: output, shape index: {}]
  %s5 = sld [smem:[#allocation0]]
  $region61: #{tpu_custom_call.1} parent=0
    _
  %s7 = ssub.s32 1, %s5
  %s8 = scalar_select 0, %s7, %s5
  $region1: #{tpu_custom_call.1} parent=0
    #allocation3 [shape = 'u8[8192]{0}', space=vmem, size = 0x2000, scoped, tag = 'input window, operand 0']
    #allocation4 [shape = 's32[2]{0}', space=sflag, size = 0x8, scoped, tag = 'scoped memory for tpu_custom_call.1']
    #allocation5 [shape = 's32[2]{0}', space=sflag, size = 0x8, scoped, tag = 'scoped memory for tpu_custom_call.1']
    #allocation6 [shape = 'u8[98304]{0}', space=vmem, size = 0x18000, scoped, tag = 'input window, operand 1, single buffered']
    #allocation7 [shape = 's32[1]{0}', space=sflag, size = 0x4, scoped, tag = 'scoped memory for tpu_custom_call.1']
    #allocation8 [shape = 'u8[8192]{0}', space=vmem, size = 0x2000, scoped, tag = 'input window, operand 3, single buffered']
    #allocation9 [shape = 'u8[32768]{0}', space=vmem, size = 0x8000, scoped, tag = 'output window, operand 0']
    %9 = vsyncpa [#allocation4], 0
    %s10 = scalar_lea.sflag [#allocation4], 1
    %11 = vsyncpa %s10, 0
    %12 = vsyncpa [#allocation7], 0
    %13 = vsyncpa [#allocation5], 0
    %s14 = scalar_lea.sflag [#allocation5], 1
    %15 = vsyncpa %s14, 0
    loop: start=0, step=1, limit=4
    $region2: #{tpu_custom_call.1} parent=1 // loop_pre_header
      _
    $region3: #{tpu_custom_call.1} parent=1 // loop_header
      %s17 = sphi 0, %s21
      %p18 = scmp.ge.s32.totalorder %s17, 4
      %s27 = sphi 0, %s29
      %s30 = sphi 0, %s27
      %s31 = sphi 0, %s30
      %s47 = sphi 0, %s31
      %s51 = sphi 0, %s51
      %s53 = sphi 0, %s51
      %s54 = sphi 0, %s53
      %s68 = sphi 0, %s54
      %s72 = sphi 0, %s72
      %s74 = sphi 0, %s72
      %s75 = sphi 0, %s74
      %s89 = sphi 0, %s75
      %s93 = sphi 0, %s93
      %s95 = sphi 0, %s93
      %s96 = sphi 0, %s95
      %s110 = sphi 0, %s96
      %s116 = sphi 0, %s118
      %s119 = sphi 0, %s116
      %s120 = sphi 0, %s119
      %s136 = sphi 0, %s120
    $region4: #{tpu_custom_call.1} parent=1 // loop_header_branch
      %20 = sbr.rel (%p18) target = $region8
    $region5: #{tpu_custom_call.1} parent=1 // loop_body
      %s22 = ssub.s32 %s17, 1
      %s23 = ssub.s32 %s17, 2
      %s24 = sadd.s32 %s17, 1
      %s25 = ssub.s32 %s17, %s24
      %p26 = scmp.eq.s32.totalorder %s25, 0
      %s28 = sadd.s32 %s27, 1
      %s29 = scalar_select %p26, %s27, %s28
      %p32 = pneg %p26
      %p33 = scmp.eq.s32.totalorder %s17, 1
      %p34 = por %p32, %p33
      %p35 = scmp.ne.s32.totalorder %s27, %s30
      %p36 = scmp.eq.s32.totalorder %s17, 0
      %p37 = por %p35, %p36
      %p38 = scmp.ne.s32.totalorder %s27, %s30
      %p39 = scmp.eq.s32.totalorder %s22, 1
      %p40 = por %p38, %p39
      %p41 = scmp.ne.s32.totalorder %s30, %s31
      %p42 = scmp.eq.s32.totalorder %s22, 0
      %p43 = por %p41, %p42
      %p44 = scmp.ne.s32.totalorder %s30, %s31
      %p45 = scmp.eq.s32.totalorder %s23, 1
      %p46 = por %p44, %p45
      %p48 = scmp.ne.s32.totalorder %s31, %s47
      %p49 = scmp.eq.s32.totalorder %s23, 0
      %p50 = por %p48, %p49
      %s52 = sadd.s32 %s51, 1
      %p55 = scmp.eq.s32.totalorder %s17, 1
      %p56 = scmp.ne.s32.totalorder %s51, %s53
      %p57 = scmp.eq.s32.totalorder %s17, 0
      %p58 = por %p56, %p57
      %p59 = scmp.ne.s32.totalorder %s51, %s53
      %p60 = scmp.eq.s32.totalorder %s22, 1
      %p61 = por %p59, %p60
      %p62 = scmp.ne.s32.totalorder %s53, %s54
      %p63 = scmp.eq.s32.totalorder %s22, 0
      %p64 = por %p62, %p63
      %p65 = scmp.ne.s32.totalorder %s53, %s54
      %p66 = scmp.eq.s32.totalorder %s23, 1
      %p67 = por %p65, %p66
      %p69 = scmp.ne.s32.totalorder %s54, %s68
      %p70 = scmp.eq.s32.totalorder %s23, 0
      %p71 = por %p69, %p70
      %s73 = sadd.s32 %s72, 1
      %p76 = scmp.eq.s32.totalorder %s17, 1
      %p77 = scmp.ne.s32.totalorder %s72, %s74
      %p78 = scmp.eq.s32.totalorder %s17, 0
      %p79 = por %p77, %p78
      %p80 = scmp.ne.s32.totalorder %s72, %s74
      %p81 = scmp.eq.s32.totalorder %s22, 1
      %p82 = por %p80, %p81
      %p83 = scmp.ne.s32.totalorder %s74, %s75
      %p84 = scmp.eq.s32.totalorder %s22, 0
      %p85 = por %p83, %p84
      %p86 = scmp.ne.s32.totalorder %s74, %s75
      %p87 = scmp.eq.s32.totalorder %s23, 1
      %p88 = por %p86, %p87
      %p90 = scmp.ne.s32.totalorder %s75, %s89
      %p91 = scmp.eq.s32.totalorder %s23, 0
      %p92 = por %p90, %p91
      %s94 = sadd.s32 %s93, 1
      %p97 = scmp.eq.s32.totalorder %s17, 1
      %p98 = scmp.ne.s32.totalorder %s93, %s95
      %p99 = scmp.eq.s32.totalorder %s17, 0
      %p100 = por %p98, %p99
      %p101 = scmp.ne.s32.totalorder %s93, %s95
      %p102 = scmp.eq.s32.totalorder %s22, 1
      %p103 = por %p101, %p102
      %p104 = scmp.ne.s32.totalorder %s95, %s96
      %p105 = scmp.eq.s32.totalorder %s22, 0
      %p106 = por %p104, %p105
      %p107 = scmp.ne.s32.totalorder %s95, %s96
      %p108 = scmp.eq.s32.totalorder %s23, 1
      %p109 = por %p107, %p108
      %p111 = scmp.ne.s32.totalorder %s96, %s110
      %p112 = scmp.eq.s32.totalorder %s23, 0
      %p113 = por %p111, %p112
      %s114 = ssub.s32 %s17, %s24
      %p115 = scmp.eq.s32.totalorder %s114, 0
      %s117 = sadd.s32 %s116, 1
      %s118 = scalar_select %p115, %s116, %s117
      %p121 = pneg %p115
      %p122 = scmp.eq.s32.totalorder %s17, 1
      %p123 = por %p121, %p122
      %p124 = scmp.ne.s32.totalorder %s116, %s119
      %p125 = scmp.eq.s32.totalorder %s17, 0
      %p126 = por %p124, %p125
      %p127 = scmp.ne.s32.totalorder %s116, %s119
      %p128 = scmp.eq.s32.totalorder %s22, 1
      %p129 = por %p127, %p128
      %p130 = scmp.ne.s32.totalorder %s119, %s120
      %p131 = scmp.eq.s32.totalorder %s22, 0
      %p132 = por %p130, %p131
      %p133 = scmp.ne.s32.totalorder %s119, %s120
      %p134 = scmp.eq.s32.totalorder %s23, 1
      %p135 = por %p133, %p134
      %p137 = scmp.ne.s32.totalorder %s120, %s136
      %p138 = scmp.eq.s32.totalorder %s23, 0
      %p139 = por %p137, %p138
      %p140 = scmp.le.s32.totalorder 1, %s17
      %p141 = scmp.lt.s32.totalorder %s17, 3
      %p142 = pnand %p140, %p141
      %p143 = pneg %p142
      // Predicated region
      $region9: #{tpu_custom_call.1} parent=5 // pred_check
        _
      $region10: #{tpu_custom_call.1} parent=5 // pred_check_branch
        %145 = sbr.rel (%p142) target = $region12
      $region11: #{tpu_custom_call.1} parent=5 // pred_region
        %s146 = ssub.s32 %s17, 1
        // Predicated region
        $region13: #{tpu_custom_call.1} parent=11 // pred_check
          %p147 = pneg %p64
        $region14: #{tpu_custom_call.1} parent=11 // pred_check_branch
          %149 = sbr.rel (%p147) target = $region16
        $region15: #{tpu_custom_call.1} parent=11 // pred_region
          %s151 = ssub.s32 3072, 3072
          %152 = vsyncadd [#allocation7], %s151
          %s153 = sshll.u32 [#allocation6], 4
          %s154 = int_to_ptr.vmem [resolvable:$true] %s153
          %159 = dma.hbm_to_vmem [thread:$0]  %s1, 3072, %s154, [#allocation7], 192, 192, 12
        $region16: #{tpu_custom_call.1} parent=11 // pred_fallthru
          _
        // Predicated region
        $region17: #{tpu_custom_call.1} parent=11 // pred_check
          %p160 = pneg %p85
        $region18: #{tpu_custom_call.1} parent=11 // pred_check_branch
          %162 = sbr.rel (%p160) target = $region20
        $region19: #{tpu_custom_call.1} parent=11 // pred_region
          _
        $region20: #{tpu_custom_call.1} parent=11 // pred_fallthru
          _
        // Predicated region
        $region21: #{tpu_custom_call.1} parent=11 // pred_check
          %p163 = pneg %p106
        $region22: #{tpu_custom_call.1} parent=11 // pred_check_branch
          %165 = sbr.rel (%p163) target = $region24
        $region23: #{tpu_custom_call.1} parent=11 // pred_region
          %s167 = ssub.s32 256, 256
          %168 = vsyncadd [#allocation7], %s167
          %s169 = sshll.u32 [#allocation8], 4
          %s170 = int_to_ptr.vmem [resolvable:$true] %s169
          %175 = dma.hbm_to_vmem [thread:$0]  %s3, 256, %s170, [#allocation7], 128, 128, 8
        $region24: #{tpu_custom_call.1} parent=11 // pred_fallthru
          _
      $region12: #{tpu_custom_call.1} parent=5 // pred_fallthru
        _
      %p176 = scmp.lt.s32.totalorder %s17, 2
      // Predicated region
      $region25: #{tpu_custom_call.1} parent=5 // pred_check
        %p177 = pneg %p176
      $region26: #{tpu_custom_call.1} parent=5 // pred_check_branch
        %179 = sbr.rel (%p177) target = $region28
      $region27: #{tpu_custom_call.1} parent=5 // pred_region
        // Predicated region
        $region29: #{tpu_custom_call.1} parent=27 // pred_check
          %p180 = pneg %p37
        $region30: #{tpu_custom_call.1} parent=27 // pred_check_branch
          %182 = sbr.rel (%p180) target = $region32
        $region31: #{tpu_custom_call.1} parent=27 // pred_region
          %s183 = sand.u32 %s27, 1
          %s184 = scalar_lea.sflag [#allocation4], %s183
          %s185 = sand.u32 %s27, 1
          %s186 = smul.addr %s185, 8
          %s187 = scalar_lea.vmem [#allocation3], %s186
          %s189 = ssub.s32 128, 128
          %190 = vsyncadd %s184, %s189
          %s191 = smul.addr %s17, 2
          %s192 = smul.addr %s191, 64
          %s193 = scalar_lea.hbm %s0, %s192
          %s194 = sshll.u32 %s187, 4
          %s195 = int_to_ptr.vmem [resolvable:$true] %s194
          %200 = dma.hbm_to_vmem [thread:$0]  %s193, 128, %s195, %s184, 64, 64, 4
        $region32: #{tpu_custom_call.1} parent=27 // pred_fallthru
          _
      $region28: #{tpu_custom_call.1} parent=5 // pred_fallthru
        _
      %p201 = scmp.le.s32.totalorder 1, %s17
      %p202 = scmp.lt.s32.totalorder %s17, 3
      %p203 = pnand %p201, %p202
      %p204 = pneg %p203
      // Predicated region
      $region33: #{tpu_custom_call.1} parent=5 // pred_check
        _
      $region34: #{tpu_custom_call.1} parent=5 // pred_check_branch
        %206 = sbr.rel (%p203) target = $region36
      $region35: #{tpu_custom_call.1} parent=5 // pred_region
        %s207 = ssub.s32 %s17, 1
        %s208 = sand.u32 %s30, 1
        %s209 = scalar_lea.sflag [#allocation4], %s208
        %s210 = sand.u32 %s30, 1
        %s211 = smul.addr %s210, 8
        %s212 = scalar_lea.vmem [#allocation3], %s211
        // Predicated region
        $region37: #{tpu_custom_call.1} parent=35 // pred_check
          %p213 = pneg %p43
        $region38: #{tpu_custom_call.1} parent=35 // pred_check_branch
          %215 = sbr.rel (%p213) target = $region40
        $region39: #{tpu_custom_call.1} parent=35 // pred_region
          %216 = dma.done %s209, 128
        $region40: #{tpu_custom_call.1} parent=35 // pred_fallthru
          _
        // Predicated region
        $region41: #{tpu_custom_call.1} parent=35 // pred_check
          %p217 = pneg %p64
        $region42: #{tpu_custom_call.1} parent=35 // pred_check_branch
          %219 = sbr.rel (%p217) target = $region44
        $region43: #{tpu_custom_call.1} parent=35 // pred_region
          %220 = dma.done [#allocation7], 3072
        $region44: #{tpu_custom_call.1} parent=35 // pred_fallthru
          _
        // Predicated region
        $region45: #{tpu_custom_call.1} parent=35 // pred_check
          %p221 = pneg %p106
        $region46: #{tpu_custom_call.1} parent=35 // pred_check_branch
          %223 = sbr.rel (%p221) target = $region48
        $region47: #{tpu_custom_call.1} parent=35 // pred_region
          %224 = dma.done [#allocation7], 256
        $region48: #{tpu_custom_call.1} parent=35 // pred_fallthru
          _
        %s225 = sand.u32 %s30, 1
        %s226 = scalar_lea.sflag [#allocation4], %s225
        %s227 = sand.u32 %s30, 1
        %s228 = smul.addr %s227, 8
        %s229 = scalar_lea.vmem [#allocation3], %s228
        %p230 = pneg %p43
        %p231 = pneg %p40
        %p232 = pneg %p64
        %p233 = pneg %p61
        %p234 = pneg %p85
        %p235 = pneg %p82
        %p236 = pneg %p106
        %p237 = pneg %p103
        %p238 = pneg %p132
        %p239 = pneg %p129
        %s240 = sand.u32 %s119, 1
        %s241 = scalar_lea.sflag [#allocation5], %s240
        %s242 = sand.u32 %s119, 1
        %s243 = smul.addr %s242, 32
        %s244 = scalar_lea.vmem [#allocation9], %s243
        %v246 = vld [vmem:[%s212] sm:$0xf]
        %v247 = vld [vmem:[%s212 + $0x4] sm:$0xf]
        %v248 = vld [vmem:[#allocation6] sm:$0xff]
        %v249 = vld [vmem:[#allocation6 + $0x8] sm:$0xf]
        %v250 = vld [vmem:[#allocation6 + $0xc] sm:$0xff]
        %v251 = vld [vmem:[#allocation6 + $0x14] sm:$0xf]
        %v252 = vld [vmem:[#allocation6 + $0x18] sm:$0xff]
        %v253 = vld [vmem:[#allocation6 + $0x20] sm:$0xf]
        %v254 = vld [vmem:[#allocation6 + $0x24] sm:$0xff]
        %v255 = vld [vmem:[#allocation6 + $0x2c] sm:$0xf]
        %v256 = vld [vmem:[#allocation6 + $0x30] sm:$0xff]
        %v257 = vld [vmem:[#allocation6 + $0x38] sm:$0xf]
        %v258 = vld [vmem:[#allocation6 + $0x3c] sm:$0xff]
        %v259 = vld [vmem:[#allocation6 + $0x44] sm:$0xf]
        %v260 = vld [vmem:[#allocation6 + $0x48] sm:$0xff]
        %v261 = vld [vmem:[#allocation6 + $0x50] sm:$0xf]
        %v262 = vld [vmem:[#allocation6 + $0x54] sm:$0xff]
        %v263 = vld [vmem:[#allocation6 + $0x5c] sm:$0xf]
        %v264 = vld [vmem:[#allocation6 + $0x60] sm:$0xff]
        %v265 = vld [vmem:[#allocation6 + $0x68] sm:$0xf]
        %v266 = vld [vmem:[#allocation6 + $0x6c] sm:$0xff]
        %v267 = vld [vmem:[#allocation6 + $0x74] sm:$0xf]
        %v268 = vld [vmem:[#allocation6 + $0x78] sm:$0xff]
        %v269 = vld [vmem:[#allocation6 + $0x80] sm:$0xf]
        %v270 = vld [vmem:[#allocation6 + $0x84] sm:$0xff]
        %v271 = vld [vmem:[#allocation6 + $0x8c] sm:$0xf]
        %v272 = vld [vmem:[#allocation6 + $0x90] sm:$0xff]
        %v273 = vld [vmem:[#allocation6 + $0x98] sm:$0xf]
        %v274 = vld [vmem:[#allocation6 + $0x9c] sm:$0xff]
        %v275 = vld [vmem:[#allocation6 + $0xa4] sm:$0xf]
        %v276 = vld [vmem:[#allocation6 + $0xa8] sm:$0xff]
        %v277 = vld [vmem:[#allocation6 + $0xb0] sm:$0xf]
        %v278 = vld [vmem:[#allocation6 + $0xb4] sm:$0xff]
        %v279 = vld [vmem:[#allocation6 + $0xbc] sm:$0xf]
        %v280 = vld [vmem:[%s2] sm:$0x7]
        %v282 = vlaneseq
        %v283 = vshrl.u32 %v282, 7
        %v284 = vsub.s32 0, %v283
        %v285 = vrot.slane %v280, %v284
        %v286 = vlaneseq
        %v287 = vshrl.u32 %v286, 7
        %v288 = vsub.s32 1, %v287
        %v289 = vrot.slane %v280, %v288
        %v290 = vlaneseq
        %v291 = vshrl.u32 %v290, 7
        %v292 = vsub.s32 2, %v291
        %v293 = vrot.slane %v280, %v292
        %v299 = vunpack.c.l.b16 %v246
        %v300 = vunpack.c.l.b16 %v247
        %v301 = vpack.c.b16 %v300, %v299
        %v335 = vunpack.c.l.b16 %v248
        %v336 = vunpack.c.h.b16 %v248
        %v337 = vunpack.c.l.b16 %v249
        %v338 = vunpack.c.l.b16 %v250
        %v339 = vunpack.c.h.b16 %v250
        %v340 = vunpack.c.l.b16 %v251
        %v341 = vunpack.c.l.b16 %v252
        %v342 = vunpack.c.h.b16 %v252
        %v343 = vunpack.c.l.b16 %v253
        %v344 = vunpack.c.l.b16 %v254
        %v345 = vunpack.c.h.b16 %v254
        %v346 = vunpack.c.l.b16 %v255
        %v347 = vunpack.c.l.b16 %v256
        %v348 = vunpack.c.h.b16 %v256
        %v349 = vunpack.c.l.b16 %v257
        %v350 = vunpack.c.l.b16 %v258
        %v351 = vunpack.c.h.b16 %v258
        %v352 = vunpack.c.l.b16 %v259
        %v353 = vunpack.c.l.b16 %v260
        %v354 = vunpack.c.h.b16 %v260
        %v355 = vunpack.c.l.b16 %v261
        %v356 = vunpack.c.l.b16 %v262
        %v357 = vunpack.c.h.b16 %v262
        %v358 = vunpack.c.l.b16 %v263
        %v359 = vunpack.c.l.b16 %v264
        %v360 = vunpack.c.h.b16 %v264
        %v361 = vunpack.c.l.b16 %v265
        %v362 = vunpack.c.l.b16 %v266
        %v363 = vunpack.c.h.b16 %v266
        %v364 = vunpack.c.l.b16 %v267
        %v365 = vunpack.c.l.b16 %v268
        %v366 = vunpack.c.h.b16 %v268
        %v367 = vunpack.c.l.b16 %v269
        %v368 = vunpack.c.l.b16 %v270
        %v369 = vunpack.c.h.b16 %v270
        %v370 = vunpack.c.l.b16 %v271
        %v371 = vunpack.c.l.b16 %v272
        %v372 = vunpack.c.h.b16 %v272
        %v373 = vunpack.c.l.b16 %v273
        %v374 = vunpack.c.l.b16 %v274
        %v375 = vunpack.c.h.b16 %v274
        %v376 = vunpack.c.l.b16 %v275
        %v377 = vunpack.c.l.b16 %v276
        %v378 = vunpack.c.h.b16 %v276
        %v379 = vunpack.c.l.b16 %v277
        %v380 = vunpack.c.l.b16 %v278
        %v381 = vunpack.c.h.b16 %v278
        %v382 = vunpack.c.l.b16 %v279
        %v383 = vpack.c.b16 %v338, %v335
        %v384 = vpack.c.b16 %v339, %v336
        %v385 = vpack.c.b16 %v340, %v337
        %v386 = vpack.c.b16 %v344, %v341
        %v387 = vpack.c.b16 %v345, %v342
        %v388 = vpack.c.b16 %v346, %v343
        %v389 = vpack.c.b16 %v350, %v347
        %v390 = vpack.c.b16 %v351, %v348
        %v391 = vpack.c.b16 %v352, %v349
        %v392 = vpack.c.b16 %v356, %v353
        %v393 = vpack.c.b16 %v357, %v354
        %v394 = vpack.c.b16 %v358, %v355
        %v395 = vpack.c.b16 %v362, %v359
        %v396 = vpack.c.b16 %v363, %v360
        %v397 = vpack.c.b16 %v364, %v361
        %v398 = vpack.c.b16 %v368, %v365
        %v399 = vpack.c.b16 %v369, %v366
        %v400 = vpack.c.b16 %v370, %v367
        %v401 = vpack.c.b16 %v374, %v371
        %v402 = vpack.c.b16 %v375, %v372
        %v403 = vpack.c.b16 %v376, %v373
        %v404 = vpack.c.b16 %v380, %v377
        %v405 = vpack.c.b16 %v381, %v378
        %v406 = vpack.c.b16 %v382, %v379
        %431 = vmatprep.subr.bf16.mxu0 %v384
        %432 = vmatpush1.bf16.msra.mxu0 %v383
        %433 = vmatprep.subr.bf16.mxu0 %v387
        %434 = vmatpush1.bf16.msra.mxu0 %v386
        %435 = vmatprep.subr.bf16.mxu0 %v390
        %436 = vmatpush1.bf16.msra.mxu0 %v389
        %437 = vmatprep.subr.bf16.mxu0 %v393
        %438 = vmatpush1.bf16.msra.mxu0 %v392
        %439 = vmatprep.subr.bf16.mxu0 %v396
        %440 = vmatpush1.bf16.msra.mxu0 %v395
        %441 = vmatprep.subr.bf16.mxu0 %v399
        %442 = vmatpush1.bf16.msra.mxu0 %v398
        %443 = vmatprep.subr.bf16.mxu0 %v402
        %444 = vmatpush1.bf16.msra.mxu0 %v401
        %445 = vmatprep.subr.bf16.mxu0 %v405
        %446 = vmatpush1.bf16.msra.mxu0 %v404
        %447 = vmatprep.subr.bf16.mxu0 0
        %448 = vmatpush1.bf16.msra.mxu0 0
        %449 = vmatprep.subr.bf16.mxu0 0
        %450 = vmatpush1.bf16.msra.mxu0 0
        %451 = vmatprep.subr.bf16.mxu0 0
        %452 = vmatpush1.bf16.msra.mxu0 0
        %453 = vmatprep.subr.bf16.mxu0 0
        %454 = vmatpush1.bf16.msra.mxu0 0
        %455 = vmatprep.subr.bf16.mxu0 0
        %456 = vmatpush1.bf16.msra.mxu0 0
        %457 = vmatprep.subr.bf16.mxu0 0
        %458 = vmatpush1.bf16.msra.mxu0 0
        %459 = vmatprep.subr.bf16.mxu0 0
        %460 = vmatpush1.bf16.msra.mxu0 0
        %461 = vmatprep.subr.bf16.mxu0 0
        %462 = vmatpush1.bf16.msra.mxu0 0
        %463 = vmatprep.mubr.bf16.mxu0 0
        %464 = vmatmul.mubr.bf16.gmra.mrb[0].mxu0 %v301
        %v465 = vpop.f32.mrb[0].mxu0
        %v466 = vadd.f32 %v285, %v465
        %v467 = vpop.f32.mrb[0].mxu0
        %v468 = vadd.f32 %v289, %v467
        %v469 = vpop.f32.mrb[0].mxu0
        %v470 = vadd.f32 %v285, %v469
        %v471 = vpop.f32.mrb[0].mxu0
        %v472 = vadd.f32 %v289, %v471
        %473 = vdwg.mxu0
        %474 = vmatprep.subr.bf16.mxu0 0
        %475 = vmatpush1.bf16.msra.mxu0 %v385
        %476 = vmatprep.subr.bf16.mxu0 0
        %477 = vmatpush1.bf16.msra.mxu0 %v388
        %478 = vmatprep.subr.bf16.mxu0 0
        %479 = vmatpush1.bf16.msra.mxu0 %v391
        %480 = vmatprep.subr.bf16.mxu0 0
        %481 = vmatpush1.bf16.msra.mxu0 %v394
        %482 = vmatprep.subr.bf16.mxu0 0
        %483 = vmatpush1.bf16.msra.mxu0 %v397
        %484 = vmatprep.subr.bf16.mxu0 0
        %485 = vmatpush1.bf16.msra.mxu0 %v400
        %486 = vmatprep.subr.bf16.mxu0 0
        %487 = vmatpush1.bf16.msra.mxu0 %v403
        %488 = vmatprep.subr.bf16.mxu0 0
        %489 = vmatpush1.bf16.msra.mxu0 %v406
        %490 = vmatprep.subr.bf16.mxu0 0
        %491 = vmatpush1.bf16.msra.mxu0 0
        %492 = vmatprep.subr.bf16.mxu0 0
        %493 = vmatpush1.bf16.msra.mxu0 0
        %494 = vmatprep.subr.bf16.mxu0 0
        %495 = vmatpush1.bf16.msra.mxu0 0
        %496 = vmatprep.subr.bf16.mxu0 0
        %497 = vmatpush1.bf16.msra.mxu0 0
        %498 = vmatprep.subr.bf16.mxu0 0
        %499 = vmatpush1.bf16.msra.mxu0 0
        %500 = vmatprep.subr.bf16.mxu0 0
        %501 = vmatpush1.bf16.msra.mxu0 0
        %502 = vmatprep.subr.bf16.mxu0 0
        %503 = vmatpush1.bf16.msra.mxu0 0
        %504 = vmatprep.subr.bf16.mxu0 0
        %505 = vmatpush1.bf16.msra.mxu0 0
        %506 = vmatprep.mubr.bf16.mxu0 0
        %507 = vmatmul.mubr.bf16.gmra.mrb[0].mxu0 %v301
        %v508 = vpop.f32.mrb[0].mxu0
        %v509 = vadd.f32 %v293, %v508
        %v510 = vpop.f32.mrb[0].mxu0
        %v511 = vpop.f32.mrb[0].mxu0
        %v512 = vadd.f32 %v293, %v511
        %v513 = vpop.f32.mrb[0].mxu0
        %514 = vdwg.mxu0
        %v515 = vpack.c.bf16 %v470, %v466
        %v516 = vpack.c.bf16 %v472, %v468
        %v517 = vpack.c.bf16 %v512, %v509
        %518 = vst [vmem:[#allocation2] sm:$0xff] %v515
        %519 = vst [vmem:[#allocation2 + $0x8] sm:$0xff] %v516
        %520 = vst [vmem:[#allocation2 + $0x10] sm:$0xff] %v517
        %v521 = vld [vmem:[#allocation2] sm:$0xff]
        %523 = vrot.lane.b32.xlu0 %v521, 96
        %v524 = vpop.permute.xlu0 %523
        %vm525 = vcmask 261120
        %v527 = vsel %vm525, %v521, 0
        %v530 = vsel %vm525, %v524, 0
        %532 = vmatprep.subr.bf16.mxu0 0
        %533 = vmatpush1.bf16.xpose.msra.mxu0 %v530
        %534 = vmatprep.subr.bf16.mxu0 0
        %535 = vmatpush1.bf16.xpose.msra.mxu0 0
        %536 = vmatprep.subr.bf16.mxu0 0
        %537 = vmatpush1.bf16.xpose.msra.mxu0 0
        %538 = vmatprep.subr.bf16.mxu0 0
        %539 = vmatpush1.bf16.xpose.msra.mxu0 0
        %540 = vmatprep.subr.bf16.mxu0 0
        %541 = vmatpush1.bf16.xpose.msra.mxu0 0
        %542 = vmatprep.subr.bf16.mxu0 0
        %543 = vmatpush1.bf16.xpose.msra.mxu0 0
        %544 = vmatprep.subr.bf16.mxu0 0
        %545 = vmatpush1.bf16.xpose.msra.mxu0 0
        %546 = vmatprep.subr.bf16.mxu0 0
        %547 = vmatpush1.bf16.xpose.msra.mxu0 0
        %548 = vmatprep.subr.bf16.mxu0 0
        %549 = vmatpush1.bf16.xpose.msra.mxu0 0
        %550 = vmatprep.subr.bf16.mxu0 0
        %551 = vmatpush1.bf16.xpose.msra.mxu0 0
        %552 = vmatprep.subr.bf16.mxu0 0
        %553 = vmatpush1.bf16.xpose.msra.mxu0 0
        %554 = vmatprep.subr.bf16.mxu0 0
        %555 = vmatpush1.bf16.xpose.msra.mxu0 0
        %556 = vmatprep.subr.bf16.mxu0 0
        %557 = vmatpush1.bf16.xpose.msra.mxu0 0
        %558 = vmatprep.subr.bf16.mxu0 0
        %559 = vmatpush1.bf16.xpose.msra.mxu0 0
        %560 = vmatprep.subr.bf16.mxu0 0
        %561 = vmatpush1.bf16.xpose.msra.mxu0 0
        %562 = vmatprep.subr.bf16.mxu0 0
        %563 = vmatpush1.bf16.xpose.msra.mxu0 0
        %564 = vmatprep.mubr.bf16.mxu0 0
        %565 = vmatmul.mubr.bf16.gmra.mrb[0].mxu0 %v527
        %v566 = vpop.f32.mrb[0].mxu0
        %v567 = vadd.f32 0.0, %v566
        %v568 = vpop.f32.mrb[0].mxu0
        %v569 = vpop.f32.mrb[0].mxu0
        %v570 = vadd.f32 0.0, %v569
        %v571 = vpop.f32.mrb[0].mxu0
        %572 = vdwg.mxu0
        %v573 = vmul.f32 %v567, 0.17677669
        %v574 = vmul.f32 %v570, 0.17677669
        %v575 = vld [vmem:[#allocation8] sm:$0xff]
        %v576 = vld [vmem:[#allocation8 + $0x8] sm:$0xff]
        %v577 = vadd.f32 %v573, %v575
        %v578 = vadd.f32 %v574, %v576
        %vm579 = vcmask 130048
        %v580 = vsel %vm579, %v577, -inf
        %581 = vmax.xlane.f32.xlu0 %v580
        %v582 = vpop.xlane.xlu0 %581
        %v583 = vsel %vm579, %v578, -inf
        %584 = vmax.xlane.f32.xlu0 %v583
        %v585 = vpop.xlane.xlu0 %584
        %v586 = vsub.f32 %v577, %v582
        %v587 = vsub.f32 %v578, %v585
        %v588 = vmul.f32 %v586, 1.442695
        %v589 = vpow.pop %v588
        %v590 = vmul.f32 %v587, 1.442695
        %v591 = vpow.pop %v590
        %v592 = vsel %vm579, %v589, 0.0
        %593 = vadd.xlane.f32.xlu0 %v592
        %v594 = vpop.xlane.xlu0 %593
        %v595 = vsel %vm579, %v591, 0.0
        %596 = vadd.xlane.f32.xlu0 %v595
        %v597 = vpop.xlane.xlu0 %596
        %v598 = vrcp.pop %v594
        %v599 = vrcp.pop %v597
        %v600 = vmul.f32 %v589, %v598
        %v601 = vmul.f32 %v591, %v599
        %v602 = vpack.c.bf16 %v601, %v600
        %603 = vrot.lane.b32.xlu0 %v521, 64
        %v604 = vpop.permute.xlu0 %603
        %v607 = vsel %vm579, %v602, 0
        %609 = vmatprep.subr.bf16.mxu0 0
        %610 = vmatpush1.bf16.msra.mxu0 %v604
        %611 = vmatprep.subr.bf16.mxu0 0
        %612 = vmatpush1.bf16.msra.mxu0 0
        %613 = vmatprep.subr.bf16.mxu0 0
        %614 = vmatpush1.bf16.msra.mxu0 0
        %615 = vmatprep.subr.bf16.mxu0 0
        %616 = vmatpush1.bf16.msra.mxu0 0
        %617 = vmatprep.subr.bf16.mxu0 0
        %618 = vmatpush1.bf16.msra.mxu0 0
        %619 = vmatprep.subr.bf16.mxu0 0
        %620 = vmatpush1.bf16.msra.mxu0 0
        %621 = vmatprep.subr.bf16.mxu0 0
        %622 = vmatpush1.bf16.msra.mxu0 0
        %623 = vmatprep.subr.bf16.mxu0 0
        %624 = vmatpush1.bf16.msra.mxu0 0
        %625 = vmatprep.subr.bf16.mxu0 0
        %626 = vmatpush1.bf16.msra.mxu0 0
        %627 = vmatprep.subr.bf16.mxu0 0
        %628 = vmatpush1.bf16.msra.mxu0 0
        %629 = vmatprep.subr.bf16.mxu0 0
        %630 = vmatpush1.bf16.msra.mxu0 0
        %631 = vmatprep.subr.bf16.mxu0 0
        %632 = vmatpush1.bf16.msra.mxu0 0
        %633 = vmatprep.subr.bf16.mxu0 0
        %634 = vmatpush1.bf16.msra.mxu0 0
        %635 = vmatprep.subr.bf16.mxu0 0
        %636 = vmatpush1.bf16.msra.mxu0 0
        %637 = vmatprep.subr.bf16.mxu0 0
        %638 = vmatpush1.bf16.msra.mxu0 0
        %639 = vmatprep.subr.bf16.mxu0 0
        %640 = vmatpush1.bf16.msra.mxu0 0
        %641 = vmatprep.mubr.bf16.mxu0 0
        %642 = vmatmul.mubr.bf16.gmra.mrb[0].mxu0 %v607
        %v643 = vpop.f32.mrb[0].mxu0
        %v644 = vadd.f32 0.0, %v643
        %v645 = vpop.f32.mrb[0].mxu0
        %v646 = vpop.f32.mrb[0].mxu0
        %v647 = vadd.f32 0.0, %v646
        %v648 = vpop.f32.mrb[0].mxu0
        %649 = vdwg.mxu0
        %v650 = vpack.c.bf16 %v647, %v644
        %v652 = vunpack.c.l.b16 %v650
        %v653 = vunpack.c.h.b16 %v650
        %v654 = vpack.c.b16 %v652, %v652
        %v655 = vpack.c.b16 %v653, %v653
        %vm658 = vcmask 257024
        %659 = vst.msk [vmem:[%s244] sm:$0xf] %vm658, %v654
        %660 = vst.msk [vmem:[%s244 + $0x4] sm:$0xf] %vm658, %v655
        %v661 = vld [vmem:[#allocation2] sm:$0xff]
        %v662 = vld [vmem:[#allocation2 + $0x8] sm:$0xff]
        %664 = vrot.lane.b32.xlu0 %v661, 32
        %v665 = vpop.permute.xlu0 %664
        %v667 = vsel %vm525, %v665, 0
        %v670 = vsel %vm525, %v662, 0
        %672 = vmatprep.subr.bf16.mxu0 0
        %673 = vmatpush1.bf16.xpose.msra.mxu0 %v670
        %674 = vmatprep.subr.bf16.mxu0 0
        %675 = vmatpush1.bf16.xpose.msra.mxu0 0
        %676 = vmatprep.subr.bf16.mxu0 0
        %677 = vmatpush1.bf16.xpose.msra.mxu0 0
        %678 = vmatprep.subr.bf16.mxu0 0
        %679 = vmatpush1.bf16.xpose.msra.mxu0 0
        %680 = vmatprep.subr.bf16.mxu0 0
        %681 = vmatpush1.bf16.xpose.msra.mxu0 0
        %682 = vmatprep.subr.bf16.mxu0 0
        %683 = vmatpush1.bf16.xpose.msra.mxu0 0
        %684 = vmatprep.subr.bf16.mxu0 0
        %685 = vmatpush1.bf16.xpose.msra.mxu0 0
        %686 = vmatprep.subr.bf16.mxu0 0
        %687 = vmatpush1.bf16.xpose.msra.mxu0 0
        %688 = vmatprep.subr.bf16.mxu0 0
        %689 = vmatpush1.bf16.xpose.msra.mxu0 0
        %690 = vmatprep.subr.bf16.mxu0 0
        %691 = vmatpush1.bf16.xpose.msra.mxu0 0
        %692 = vmatprep.subr.bf16.mxu0 0
        %693 = vmatpush1.bf16.xpose.msra.mxu0 0
        %694 = vmatprep.subr.bf16.mxu0 0
        %695 = vmatpush1.bf16.xpose.msra.mxu0 0
        %696 = vmatprep.subr.bf16.mxu0 0
        %697 = vmatpush1.bf16.xpose.msra.mxu0 0
        %698 = vmatprep.subr.bf16.mxu0 0
        %699 = vmatpush1.bf16.xpose.msra.mxu0 0
        %700 = vmatprep.subr.bf16.mxu0 0
        %701 = vmatpush1.bf16.xpose.msra.mxu0 0
        %702 = vmatprep.subr.bf16.mxu0 0
        %703 = vmatpush1.bf16.xpose.msra.mxu0 0
        %704 = vmatprep.mubr.bf16.mxu0 0
        %705 = vmatmul.mubr.bf16.gmra.mrb[0].mxu0 %v667
        %v706 = vpop.f32.mrb[0].mxu0
        %v707 = vadd.f32 0.0, %v706
        %v708 = vpop.f32.mrb[0].mxu0
        %v709 = vpop.f32.mrb[0].mxu0
        %v710 = vadd.f32 0.0, %v709
        %v711 = vpop.f32.mrb[0].mxu0
        %712 = vdwg.mxu0
        %v713 = vmul.f32 %v707, 0.17677669
        %v714 = vmul.f32 %v710, 0.17677669
        %v715 = vld [vmem:[#allocation8] sm:$0xff]
        %v716 = vld [vmem:[#allocation8 + $0x8] sm:$0xff]
        %v717 = vadd.f32 %v713, %v715
        %v718 = vadd.f32 %v714, %v716
        %v719 = vsel %vm579, %v717, -inf
        %720 = vmax.xlane.f32.xlu0 %v719
        %v721 = vpop.xlane.xlu0 %720
        %v722 = vsel %vm579, %v718, -inf
        %723 = vmax.xlane.f32.xlu0 %v722
        %v724 = vpop.xlane.xlu0 %723
        %v725 = vsub.f32 %v717, %v721
        %v726 = vsub.f32 %v718, %v724
        %v727 = vmul.f32 %v725, 1.442695
        %v728 = vpow.pop %v727
        %v729 = vmul.f32 %v726, 1.442695
        %v730 = vpow.pop %v729
        %v731 = vsel %vm579, %v728, 0.0
        %732 = vadd.xlane.f32.xlu0 %v731
        %v733 = vpop.xlane.xlu0 %732
        %v734 = vsel %vm579, %v730, 0.0
        %735 = vadd.xlane.f32.xlu0 %v734
        %v736 = vpop.xlane.xlu0 %735
        %v737 = vrcp.pop %v733
        %v738 = vrcp.pop %v736
        %v739 = vmul.f32 %v728, %v737
        %v740 = vmul.f32 %v730, %v738
        %v741 = vpack.c.bf16 %v740, %v739
        %743 = vrot.lane.b32.xlu0 %v662, 96
        %v744 = vpop.permute.xlu0 %743
        %v747 = vsel %vm579, %v741, 0
        %749 = vmatprep.subr.bf16.mxu0 0
        %750 = vmatpush1.bf16.msra.mxu0 %v744
        %751 = vmatprep.subr.bf16.mxu0 0
        %752 = vmatpush1.bf16.msra.mxu0 0
        %753 = vmatprep.subr.bf16.mxu0 0
        %754 = vmatpush1.bf16.msra.mxu0 0
        %755 = vmatprep.subr.bf16.mxu0 0
        %756 = vmatpush1.bf16.msra.mxu0 0
        %757 = vmatprep.subr.bf16.mxu0 0
        %758 = vmatpush1.bf16.msra.mxu0 0
        %759 = vmatprep.subr.bf16.mxu0 0
        %760 = vmatpush1.bf16.msra.mxu0 0
        %761 = vmatprep.subr.bf16.mxu0 0
        %762 = vmatpush1.bf16.msra.mxu0 0
        %763 = vmatprep.subr.bf16.mxu0 0
        %764 = vmatpush1.bf16.msra.mxu0 0
        %765 = vmatprep.subr.bf16.mxu0 0
        %766 = vmatpush1.bf16.msra.mxu0 0
        %767 = vmatprep.subr.bf16.mxu0 0
        %768 = vmatpush1.bf16.msra.mxu0 0
        %769 = vmatprep.subr.bf16.mxu0 0
        %770 = vmatpush1.bf16.msra.mxu0 0
        %771 = vmatprep.subr.bf16.mxu0 0
        %772 = vmatpush1.bf16.msra.mxu0 0
        %773 = vmatprep.subr.bf16.mxu0 0
        %774 = vmatpush1.bf16.msra.mxu0 0
        %775 = vmatprep.subr.bf16.mxu0 0
        %776 = vmatpush1.bf16.msra.mxu0 0
        %777 = vmatprep.subr.bf16.mxu0 0
        %778 = vmatpush1.bf16.msra.mxu0 0
        %779 = vmatprep.subr.bf16.mxu0 0
        %780 = vmatpush1.bf16.msra.mxu0 0
        %781 = vmatprep.mubr.bf16.mxu0 0
        %782 = vmatmul.mubr.bf16.gmra.mrb[0].mxu0 %v747
        %v783 = vpop.f32.mrb[0].mxu0
        %v784 = vadd.f32 0.0, %v783
        %v785 = vpop.f32.mrb[0].mxu0
        %v786 = vpop.f32.mrb[0].mxu0
        %v787 = vadd.f32 0.0, %v786
        %v788 = vpop.f32.mrb[0].mxu0
        %789 = vdwg.mxu0
        %v790 = vpack.c.bf16 %v787, %v784
        %v792 = vunpack.c.l.b16 %v790
        %v793 = vunpack.c.h.b16 %v790
        %v794 = vpack.c.b16 %v792, %v792
        %v795 = vpack.c.b16 %v793, %v793
        %s798 = scalar_lea.vmem %s244, 8 [#allocation9]
        %799 = vst.msk [vmem:[%s798] sm:$0xf] %vm658, %v794
        %800 = vst.msk [vmem:[%s798 + $0x4] sm:$0xf] %vm658, %v795
        %v801 = vld [vmem:[#allocation2 + $0x8] sm:$0xff]
        %v802 = vld [vmem:[#allocation2 + $0x10] sm:$0xff]
        %804 = vrot.lane.b32.xlu0 %v801, 64
        %v805 = vpop.permute.xlu0 %804
        %806 = vrot.lane.b32.xlu0 %v801, 32
        %v807 = vpop.permute.xlu0 %806
        %v809 = vsel %vm525, %v805, 0
        %v812 = vsel %vm525, %v807, 0
        %814 = vmatprep.subr.bf16.mxu0 0
        %815 = vmatpush1.bf16.xpose.msra.mxu0 %v812
        %816 = vmatprep.subr.bf16.mxu0 0
        %817 = vmatpush1.bf16.xpose.msra.mxu0 0
        %818 = vmatprep.subr.bf16.mxu0 0
        %819 = vmatpush1.bf16.xpose.msra.mxu0 0
        %820 = vmatprep.subr.bf16.mxu0 0
        %821 = vmatpush1.bf16.xpose.msra.mxu0 0
        %822 = vmatprep.subr.bf16.mxu0 0
        %823 = vmatpush1.bf16.xpose.msra.mxu0 0
        %824 = vmatprep.subr.bf16.mxu0 0
        %825 = vmatpush1.bf16.xpose.msra.mxu0 0
        %826 = vmatprep.subr.bf16.mxu0 0
        %827 = vmatpush1.bf16.xpose.msra.mxu0 0
        %828 = vmatprep.subr.bf16.mxu0 0
        %829 = vmatpush1.bf16.xpose.msra.mxu0 0
        %830 = vmatprep.subr.bf16.mxu0 0
        %831 = vmatpush1.bf16.xpose.msra.mxu0 0
        %832 = vmatprep.subr.bf16.mxu0 0
        %833 = vmatpush1.bf16.xpose.msra.mxu0 0
        %834 = vmatprep.subr.bf16.mxu0 0
        %835 = vmatpush1.bf16.xpose.msra.mxu0 0
        %836 = vmatprep.subr.bf16.mxu0 0
        %837 = vmatpush1.bf16.xpose.msra.mxu0 0
        %838 = vmatprep.subr.bf16.mxu0 0
        %839 = vmatpush1.bf16.xpose.msra.mxu0 0
        %840 = vmatprep.subr.bf16.mxu0 0
        %841 = vmatpush1.bf16.xpose.msra.mxu0 0
        %842 = vmatprep.subr.bf16.mxu0 0
        %843 = vmatpush1.bf16.xpose.msra.mxu0 0
        %844 = vmatprep.subr.bf16.mxu0 0
        %845 = vmatpush1.bf16.xpose.msra.mxu0 0
        %846 = vmatprep.mubr.bf16.mxu0 0
        %847 = vmatmul.mubr.bf16.gmra.mrb[0].mxu0 %v809
        %v848 = vpop.f32.mrb[0].mxu0
        %v849 = vadd.f32 0.0, %v848
        %v850 = vpop.f32.mrb[0].mxu0
        %v851 = vpop.f32.mrb[0].mxu0
        %v852 = vadd.f32 0.0, %v851
        %v853 = vpop.f32.mrb[0].mxu0
        %854 = vdwg.mxu0
        %v855 = vmul.f32 %v849, 0.17677669
        %v856 = vmul.f32 %v852, 0.17677669
        %v857 = vld [vmem:[#allocation8] sm:$0xff]
        %v858 = vld [vmem:[#allocation8 + $0x8] sm:$0xff]
        %v859 = vadd.f32 %v855, %v857
        %v860 = vadd.f32 %v856, %v858
        %v861 = vsel %vm579, %v859, -inf
        %862 = vmax.xlane.f32.xlu0 %v861
        %v863 = vpop.xlane.xlu0 %862
        %v864 = vsel %vm579, %v860, -inf
        %865 = vmax.xlane.f32.xlu0 %v864
        %v866 = vpop.xlane.xlu0 %865
        %v867 = vsub.f32 %v859, %v863
        %v868 = vsub.f32 %v860, %v866
        %v869 = vmul.f32 %v867, 1.442695
        %v870 = vpow.pop %v869
        %v871 = vmul.f32 %v868, 1.442695
        %v872 = vpow.pop %v871
        %v873 = vsel %vm579, %v870, 0.0
        %874 = vadd.xlane.f32.xlu0 %v873
        %v875 = vpop.xlane.xlu0 %874
        %v876 = vsel %vm579, %v872, 0.0
        %877 = vadd.xlane.f32.xlu0 %v876
        %v878 = vpop.xlane.xlu0 %877
        %v879 = vrcp.pop %v875
        %v880 = vrcp.pop %v878
        %v881 = vmul.f32 %v870, %v879
        %v882 = vmul.f32 %v872, %v880
        %v883 = vpack.c.bf16 %v882, %v881
        %v885 = vsel %vm579, %v883, 0
        %887 = vmatprep.subr.bf16.mxu0 0
        %888 = vmatpush1.bf16.msra.mxu0 %v802
        %889 = vmatprep.subr.bf16.mxu0 0
        %890 = vmatpush1.bf16.msra.mxu0 0
        %891 = vmatprep.subr.bf16.mxu0 0
        %892 = vmatpush1.bf16.msra.mxu0 0
        %893 = vmatprep.subr.bf16.mxu0 0
        %894 = vmatpush1.bf16.msra.mxu0 0
        %895 = vmatprep.subr.bf16.mxu0 0
        %896 = vmatpush1.bf16.msra.mxu0 0
        %897 = vmatprep.subr.bf16.mxu0 0
        %898 = vmatpush1.bf16.msra.mxu0 0
        %899 = vmatprep.subr.bf16.mxu0 0
        %900 = vmatpush1.bf16.msra.mxu0 0
        %901 = vmatprep.subr.bf16.mxu0 0
        %902 = vmatpush1.bf16.msra.mxu0 0
        %903 = vmatprep.subr.bf16.mxu0 0
        %904 = vmatpush1.bf16.msra.mxu0 0
        %905 = vmatprep.subr.bf16.mxu0 0
        %906 = vmatpush1.bf16.msra.mxu0 0
        %907 = vmatprep.subr.bf16.mxu0 0
        %908 = vmatpush1.bf16.msra.mxu0 0
        %909 = vmatprep.subr.bf16.mxu0 0
        %910 = vmatpush1.bf16.msra.mxu0 0
        %911 = vmatprep.subr.bf16.mxu0 0
        %912 = vmatpush1.bf16.msra.mxu0 0
        %913 = vmatprep.subr.bf16.mxu0 0
        %914 = vmatpush1.bf16.msra.mxu0 0
        %915 = vmatprep.subr.bf16.mxu0 0
        %916 = vmatpush1.bf16.msra.mxu0 0
        %917 = vmatprep.subr.bf16.mxu0 0
        %918 = vmatpush1.bf16.msra.mxu0 0
        %919 = vmatprep.mubr.bf16.mxu0 0
        %920 = vmatmul.mubr.bf16.gmra.mrb[0].mxu0 %v885
        %v921 = vpop.f32.mrb[0].mxu0
        %v922 = vadd.f32 0.0, %v921
        %v923 = vpop.f32.mrb[0].mxu0
        %v924 = vpop.f32.mrb[0].mxu0
        %v925 = vadd.f32 0.0, %v924
        %v926 = vpop.f32.mrb[0].mxu0
        %927 = vdwg.mxu0
        %v928 = vpack.c.bf16 %v925, %v922
        %v930 = vunpack.c.l.b16 %v928
        %v931 = vunpack.c.h.b16 %v928
        %v932 = vpack.c.b16 %v930, %v930
        %v933 = vpack.c.b16 %v931, %v931
        %s936 = scalar_lea.vmem %s244, 16 [#allocation9]
        %937 = vst.msk [vmem:[%s936] sm:$0xf] %vm658, %v932
        %938 = vst.msk [vmem:[%s936 + $0x4] sm:$0xf] %vm658, %v933
        %v939 = vld [vmem:[#allocation2 + $0x10] sm:$0xff]
        %941 = vrot.lane.b32.xlu0 %v939, 96
        %v942 = vpop.permute.xlu0 %941
        %943 = vrot.lane.b32.xlu0 %v939, 64
        %v944 = vpop.permute.xlu0 %943
        %v946 = vsel %vm525, %v942, 0
        %v949 = vsel %vm525, %v944, 0
        %951 = vmatprep.subr.bf16.mxu0 0
        %952 = vmatpush1.bf16.xpose.msra.mxu0 %v949
        %953 = vmatprep.subr.bf16.mxu0 0
        %954 = vmatpush1.bf16.xpose.msra.mxu0 0
        %955 = vmatprep.subr.bf16.mxu0 0
        %956 = vmatpush1.bf16.xpose.msra.mxu0 0
        %957 = vmatprep.subr.bf16.mxu0 0
        %958 = vmatpush1.bf16.xpose.msra.mxu0 0
        %959 = vmatprep.subr.bf16.mxu0 0
        %960 = vmatpush1.bf16.xpose.msra.mxu0 0
        %961 = vmatprep.subr.bf16.mxu0 0
        %962 = vmatpush1.bf16.xpose.msra.mxu0 0
        %963 = vmatprep.subr.bf16.mxu0 0
        %964 = vmatpush1.bf16.xpose.msra.mxu0 0
        %965 = vmatprep.subr.bf16.mxu0 0
        %966 = vmatpush1.bf16.xpose.msra.mxu0 0
        %967 = vmatprep.subr.bf16.mxu0 0
        %968 = vmatpush1.bf16.xpose.msra.mxu0 0
        %969 = vmatprep.subr.bf16.mxu0 0
        %970 = vmatpush1.bf16.xpose.msra.mxu0 0
        %971 = vmatprep.subr.bf16.mxu0 0
        %972 = vmatpush1.bf16.xpose.msra.mxu0 0
        %973 = vmatprep.subr.bf16.mxu0 0
        %974 = vmatpush1.bf16.xpose.msra.mxu0 0
        %975 = vmatprep.subr.bf16.mxu0 0
        %976 = vmatpush1.bf16.xpose.msra.mxu0 0
        %977 = vmatprep.subr.bf16.mxu0 0
        %978 = vmatpush1.bf16.xpose.msra.mxu0 0
        %979 = vmatprep.subr.bf16.mxu0 0
        %980 = vmatpush1.bf16.xpose.msra.mxu0 0
        %981 = vmatprep.subr.bf16.mxu0 0
        %982 = vmatpush1.bf16.xpose.msra.mxu0 0
        %983 = vmatprep.mubr.bf16.mxu0 0
        %984 = vmatmul.mubr.bf16.gmra.mrb[0].mxu0 %v946
        %v985 = vpop.f32.mrb[0].mxu0
        %v986 = vadd.f32 0.0, %v985
        %v987 = vpop.f32.mrb[0].mxu0
        %v988 = vpop.f32.mrb[0].mxu0
        %v989 = vadd.f32 0.0, %v988
        %v990 = vpop.f32.mrb[0].mxu0
        %991 = vdwg.mxu0
        %v992 = vmul.f32 %v986, 0.17677669
        %v993 = vmul.f32 %v989, 0.17677669
        %v994 = vld [vmem:[#allocation8] sm:$0xff]
        %v995 = vld [vmem:[#allocation8 + $0x8] sm:$0xff]
        %v996 = vadd.f32 %v992, %v994
        %v997 = vadd.f32 %v993, %v995
        %v998 = vsel %vm579, %v996, -inf
        %999 = vmax.xlane.f32.xlu0 %v998
        %v1000 = vpop.xlane.xlu0 %999
        %v1001 = vsel %vm579, %v997, -inf
        %1002 = vmax.xlane.f32.xlu0 %v1001
        %v1003 = vpop.xlane.xlu0 %1002
        %v1004 = vsub.f32 %v996, %v1000
        %v1005 = vsub.f32 %v997, %v1003
        %v1006 = vmul.f32 %v1004, 1.442695
        %v1007 = vpow.pop %v1006
        %v1008 = vmul.f32 %v1005, 1.442695
        %v1009 = vpow.pop %v1008
        %v1010 = vsel %vm579, %v1007, 0.0
        %1011 = vadd.xlane.f32.xlu0 %v1010
        %v1012 = vpop.xlane.xlu0 %1011
        %v1013 = vsel %vm579, %v1009, 0.0
        %1014 = vadd.xlane.f32.xlu0 %v1013
        %v1015 = vpop.xlane.xlu0 %1014
        %v1016 = vrcp.pop %v1012
        %v1017 = vrcp.pop %v1015
        %v1018 = vmul.f32 %v1007, %v1016
        %v1019 = vmul.f32 %v1009, %v1017
        %v1020 = vpack.c.bf16 %v1019, %v1018
        %1021 = vrot.lane.b32.xlu0 %v939, 32
        %v1022 = vpop.permute.xlu0 %1021
        %v1025 = vsel %vm579, %v1020, 0
        %1027 = vmatprep.subr.bf16.mxu0 0
        %1028 = vmatpush1.bf16.msra.mxu0 %v1022
        %1029 = vmatprep.subr.bf16.mxu0 0
        %1030 = vmatpush1.bf16.msra.mxu0 0
        %1031 = vmatprep.subr.bf16.mxu0 0
        %1032 = vmatpush1.bf16.msra.mxu0 0
        %1033 = vmatprep.subr.bf16.mxu0 0
        %1034 = vmatpush1.bf16.msra.mxu0 0
        %1035 = vmatprep.subr.bf16.mxu0 0
        %1036 = vmatpush1.bf16.msra.mxu0 0
        %1037 = vmatprep.subr.bf16.mxu0 0
        %1038 = vmatpush1.bf16.msra.mxu0 0
        %1039 = vmatprep.subr.bf16.mxu0 0
        %1040 = vmatpush1.bf16.msra.mxu0 0
        %1041 = vmatprep.subr.bf16.mxu0 0
        %1042 = vmatpush1.bf16.msra.mxu0 0
        %1043 = vmatprep.subr.bf16.mxu0 0
        %1044 = vmatpush1.bf16.msra.mxu0 0
        %1045 = vmatprep.subr.bf16.mxu0 0
        %1046 = vmatpush1.bf16.msra.mxu0 0
        %1047 = vmatprep.subr.bf16.mxu0 0
        %1048 = vmatpush1.bf16.msra.mxu0 0
        %1049 = vmatprep.subr.bf16.mxu0 0
        %1050 = vmatpush1.bf16.msra.mxu0 0
        %1051 = vmatprep.subr.bf16.mxu0 0
        %1052 = vmatpush1.bf16.msra.mxu0 0
        %1053 = vmatprep.subr.bf16.mxu0 0
        %1054 = vmatpush1.bf16.msra.mxu0 0
        %1055 = vmatprep.subr.bf16.mxu0 0
        %1056 = vmatpush1.bf16.msra.mxu0 0
        %1057 = vmatprep.subr.bf16.mxu0 0
        %1058 = vmatpush1.bf16.msra.mxu0 0
        %1059 = vmatprep.mubr.bf16.mxu0 0
        %1060 = vmatmul.mubr.bf16.gmra.mrb[0].mxu0 %v1025
        %v1061 = vpop.f32.mrb[0].mxu0
        %v1062 = vadd.f32 0.0, %v1061
        %v1063 = vpop.f32.mrb[0].mxu0
        %v1064 = vpop.f32.mrb[0].mxu0
        %v1065 = vadd.f32 0.0, %v1064
        %v1066 = vpop.f32.mrb[0].mxu0
        %1067 = vdwg.mxu0
        %v1068 = vpack.c.bf16 %v1065, %v1062
        %v1070 = vunpack.c.l.b16 %v1068
        %v1071 = vunpack.c.h.b16 %v1068
        %v1072 = vpack.c.b16 %v1070, %v1070
        %v1073 = vpack.c.b16 %v1071, %v1071
        %s1076 = scalar_lea.vmem %s244, 24 [#allocation9]
        %1077 = vst.msk [vmem:[%s1076] sm:$0xf] %vm658, %v1072
        %1078 = vst.msk [vmem:[%s1076 + $0x4] sm:$0xf] %vm658, %v1073
        %s1079 = sand.u32 %s119, 1
        %s1080 = scalar_lea.sflag [#allocation5], %s1079
        %s1081 = sand.u32 %s119, 1
        %s1082 = smul.addr %s1081, 32
        %s1083 = scalar_lea.vmem [#allocation9], %s1082
        // Predicated region
        $region49: #{tpu_custom_call.1} parent=35 // pred_check
          %p1084 = pneg %p129
        $region50: #{tpu_custom_call.1} parent=35 // pred_check_branch
          %1086 = sbr.rel (%p1084) target = $region52
        $region51: #{tpu_custom_call.1} parent=35 // pred_region
          %s1088 = ssub.s32 512, 512
          %1089 = vsyncadd %s1080, %s1088
          %s1090 = smul.addr %s22, 8
          %s1091 = smul.addr %s1090, 64
          %s1092 = scalar_lea.hbm %s4, %s1091
          %s1093 = sshll.u32 %s1083, 4
          %s1094 = int_to_ptr.vmem [resolvable:$true] %s1093
          %1099 = dma.vmem_to_hbm [thread:$0]  %s1094, 512, %s1092, %s1080, 64, 64, 4
        $region52: #{tpu_custom_call.1} parent=35 // pred_fallthru
          _
      $region36: #{tpu_custom_call.1} parent=5 // pred_fallthru
        _
      %p1100 = scmp.le.s32.totalorder 2, %s17
      // Predicated region
      $region53: #{tpu_custom_call.1} parent=5 // pred_check
        %p1101 = pneg %p1100
      $region54: #{tpu_custom_call.1} parent=5 // pred_check_branch
        %1103 = sbr.rel (%p1101) target = $region56
      $region55: #{tpu_custom_call.1} parent=5 // pred_region
        %s1104 = ssub.s32 %s17, 2
        // Predicated region
        $region57: #{tpu_custom_call.1} parent=55 // pred_check
          %p1105 = pneg %p135
        $region58: #{tpu_custom_call.1} parent=55 // pred_check_branch
          %1107 = sbr.rel (%p1105) target = $region60
        $region59: #{tpu_custom_call.1} parent=55 // pred_region
          %s1108 = sand.u32 %s120, 1
          %s1109 = scalar_lea.sflag [#allocation5], %s1108
          %s1110 = sand.u32 %s120, 1
          %s1111 = smul.addr %s1110, 32
          %s1112 = scalar_lea.vmem [#allocation9], %s1111
          %1113 = dma.done %s1109, 512
        $region60: #{tpu_custom_call.1} parent=55 // pred_fallthru
          _
      $region56: #{tpu_custom_call.1} parent=5 // pred_fallthru
        _
    $region6: #{tpu_custom_call.1} parent=1 // loop_footer
      %s21 = sadd.s32 1, %s17
    $region7: #{tpu_custom_call.1} parent=1 // loop_footer_branch
      %16 = sbr.rel target = $region3
    $region8: #{tpu_custom_call.1} parent=1 // loop_exit
      _
    %1114 = vsyncpa [#allocation4], 1
    %s1115 = scalar_lea.sflag [#allocation4], 1
    %1116 = vsyncpa %s1115, 1
    %1117 = vsyncpa [#allocation7], 1
    %1118 = vsyncpa [#allocation5], 1
    %s1119 = scalar_lea.sflag [#allocation5], 1
    %1120 = vsyncpa %s1119, 1

</llo_original>
